<compile_context>
chip_gen: v7x
topology: tpu7x:2x2x1
jax: 0.10.0
libtpu: 0.0.40
codegen_flags: <defaults>
</compile_context>

<pallas_src>
import jax
import jax.numpy as jnp
from jax.experimental import pallas as pl
from jax.experimental.pallas import tpu as pltpu


def _nconv_kernel(a_ref, x_ref, o_ref):
    """out[b] = A @ x[b] for every (V, L) slab in this batch tile.

    a_ref: (W, V)      mixing matrix, VMEM-resident across grid steps
    x_ref: (Bk, V, L)  batch tile of the input (natural layout)
    o_ref: (Bk, W, L)  batch tile of the output
    """
    a = a_ref[...]
    # Static unroll over the (small) batch tile: Bk independent MXU matmuls,
    # each (W, V) @ (V, L) with f32 accumulation.
    for b in range(x_ref.shape[0]):
        o_ref[b] = jnp.dot(
            a, x_ref[b], preferred_element_type=jnp.float32
        ).astype(o_ref.dtype)


def _round_up(a: int, m: int) -> int:
    return ((a + m - 1) // m) * m


def nconv(x, A, *, block_b=None, vmem_block_budget=32 << 20, max_unroll=64):
    """Pallas implementation of einsum('ncvl,wv->ncwl', x, A)."""
    N, C, V, L = x.shape
    W, V2 = A.shape
    assert V == V2, f"A second dim ({V2}) must match x node dim ({V})"

    B = N * C
    x3 = x.reshape(B, V, L)  # free reshape: contiguous dims merge, no transpose

    itemsize = jnp.dtype(x.dtype).itemsize
    sub = max(8, 32 // itemsize)        # sublane packing (f32 -> 8, bf16 -> 16)
    lane_pad = _round_up(L, 128)
    # VMEM footprint (vreg-tiled) of one batch element's input + output slab.
    per_b_bytes = (_round_up(V, sub) + _round_up(W, sub)) * lane_pad * itemsize

    if block_b is None:
        # Fit double-buffered (x tile + out tile) inside the VMEM budget.
        block_b = max(1, vmem_block_budget // (2 * per_b_bytes))
    block_b = min(block_b, max_unroll)              # bound the kernel unroll
    block_b = min(block_b, max(1, pl.cdiv(B, 2)))   # >= 2 grid steps -> both v7x TCs busy
    block_b = max(1, min(block_b, B))
    grid = (pl.cdiv(B, block_b),)

    cost = pl.CostEstimate(
        flops=2 * B * W * V * L,
        bytes_accessed=itemsize * B * L * (V + W)
        + jnp.dtype(A.dtype).itemsize * W * V,
        transcendentals=0,
    )

    out3 = pl.pallas_call(
        _nconv_kernel,
        out_shape=jax.ShapeDtypeStruct((B, W, L), x.dtype),
        grid=grid,
        in_specs=[
            # A: constant index_map -> DMA'd once, stays resident in VMEM.
            pl.BlockSpec((W, V), lambda i: (0, 0)),
            # x: tiled only along the fused batch axis; V and L stay full-extent
            # so no padding is needed and boundary tiles are masked by Mosaic.
            pl.BlockSpec((block_b, V, L), lambda i: (i, 0, 0)),
        ],
        out_specs=pl.BlockSpec((block_b, W, L), lambda i: (i, 0, 0)),
        compiler_params=pltpu.CompilerParams(
            dimension_semantics=("parallel",),
            vmem_limit_bytes=48 << 20,
        ),
        cost_estimate=cost,
    )(A, x3)

    return out3.reshape(N, C, W, L)  # free reshape back


def nconv_reference(x, A):
    return jnp.einsum("ncvl,wv->ncwl", x, A)


if __name__ == "__main__":
    key = jax.random.PRNGKey(0)
    kx, ka, kx2, ka2, kx3, ka3 = jax.random.split(key, 6)

    # Case 1: small aligned shapes (batch=2, channels=4, nodes V=16, seq L=16, W=16).
    N, C, V, L, W = 2, 4, 16, 16, 16
    x = jax.random.normal(kx, (N, C, V, L), dtype=jnp.float32)
    A = jax.random.normal(ka, (W, V), dtype=jnp.float32)
    out = jax.block_until_ready(nconv(x, A))
    ref = nconv_reference(x, A)
    assert out.shape == (N, C, W, L), out.shape
    assert jnp.allclose(out, ref, atol=1e-3, rtol=1e-3), (
        f"max abs err {jnp.max(jnp.abs(out - ref))}"
    )

    # Case 2: unaligned graph-wavenet-ish dims (V=13, L=12, W=10) — no padding used.
    N2, C2, V2, L2, W2 = 2, 4, 13, 12, 10
    x2 = jax.random.normal(kx2, (N2, C2, V2, L2), dtype=jnp.float32)
    A2 = jax.random.normal(ka2, (W2, V2), dtype=jnp.float32)
    out2 = jax.block_until_ready(nconv(x2, A2))
    ref2 = nconv_reference(x2, A2)
    assert out2.shape == (N2, C2, W2, L2), out2.shape
    assert jnp.allclose(out2, ref2, atol=1e-3, rtol=1e-3), (
        f"max abs err {jnp.max(jnp.abs(out2 - ref2))}"
    )

    # Case 3: batch tile that does not divide B (B=9, block_b=5) — exercises the
    # masked boundary grid step introduced by the cdiv/no-pad design.
    N3, C3, V3, L3, W3 = 3, 3, 13, 12, 10
    x3 = jax.random.normal(kx3, (N3, C3, V3, L3), dtype=jnp.float32)
    A3 = jax.random.normal(ka3, (W3, V3), dtype=jnp.float32)
    out3 = jax.block_until_ready(nconv(x3, A3))
    ref3 = nconv_reference(x3, A3)
    assert out3.shape == (N3, C3, W3, L3), out3.shape
    assert jnp.allclose(out3, ref3, atol=1e-3, rtol=1e-3), (
        f"max abs err {jnp.max(jnp.abs(out3 - ref3))}"
    )

    print("KERNEL_OK")
</pallas_src>

<mosaic_0001>
module attributes {stable_mosaic.version = 11 : i64} {
  func.func @_nconv_kernel(%arg0: i32, %arg1: memref<16x16xf32, #tpu.memory_space<vmem>>, %arg2: memref<4x16x16xf32, #tpu.memory_space<vmem>>, %arg3: memref<4x16x16xf32, #tpu.memory_space<vmem>>) attributes {dimension_semantics = [#tpu.dimension_semantics<parallel>], iteration_bounds = array<i64: 2>, scalar_prefetch = 0 : i64, scratch_operands = 0 : i64, tpu.core_type = #tpu.core_type<tc>, window_params = [{pipeline_mode = #tpu.pipeline_mode<synchronous>, transform_indices = @transform_0, window_bounds = array<i64: 16, 16>}, {transform_indices = @transform_1, window_bounds = array<i64: 4, 16, 16>}, {transform_indices = @transform_2, window_bounds = array<i64: 4, 16, 16>}]} {
    %c0 = arith.constant 0 : index
    %c0_0 = arith.constant 0 : index
    %0 = vector.load %arg1[%c0, %c0_0] : memref<16x16xf32, #tpu.memory_space<vmem>>, vector<16x16xf32>
    %c0_1 = arith.constant 0 : index
    %c0_2 = arith.constant 0 : index
    %c0_3 = arith.constant 0 : index
    %1 = vector.load %arg2[%c0_1, %c0_2, %c0_3] : memref<4x16x16xf32, #tpu.memory_space<vmem>>, vector<1x16x16xf32>
    %2 = vector.shape_cast %1 : vector<1x16x16xf32> to vector<16x16xf32>
    %cst = arith.constant dense<0.000000e+00> : vector<16x16xf32>
    %3 = tpu.matmul %0, %2, %cst {dimension_numbers = #tpu.dot_dimension_numbers<[1], [0], [0], [1], [0, 0, 1, 1], [], []>} : vector<16x16xf32>, vector<16x16xf32>, vector<16x16xf32> -> vector<16x16xf32>
    %c0_4 = arith.constant 0 : index
    %c0_5 = arith.constant 0 : index
    %c0_6 = arith.constant 0 : index
    %4 = vector.load %arg3[%c0_4, %c0_5, %c0_6] : memref<4x16x16xf32, #tpu.memory_space<vmem>>, vector<1x16x16xf32>
    %5 = vector.shape_cast %4 : vector<1x16x16xf32> to vector<16x16xf32>
    %6 = vector.shape_cast %3 : vector<16x16xf32> to vector<1x16x16xf32>
    tpu.vector_store %arg3[%c0_4, %c0_5, %c0_6], %6 {strides = array<i32>} : memref<4x16x16xf32, #tpu.memory_space<vmem>>, vector<1x16x16xf32>,
    %c1 = arith.constant 1 : index
    %c0_7 = arith.constant 0 : index
    %c0_8 = arith.constant 0 : index
    %7 = vector.load %arg2[%c1, %c0_7, %c0_8] : memref<4x16x16xf32, #tpu.memory_space<vmem>>, vector<1x16x16xf32>
    %8 = vector.shape_cast %7 : vector<1x16x16xf32> to vector<16x16xf32>
    %cst_9 = arith.constant dense<0.000000e+00> : vector<16x16xf32>
    %9 = tpu.matmul %0, %8, %cst_9 {dimension_numbers = #tpu.dot_dimension_numbers<[1], [0], [0], [1], [0, 0, 1, 1], [], []>} : vector<16x16xf32>, vector<16x16xf32>, vector<16x16xf32> -> vector<16x16xf32>
    %c1_10 = arith.constant 1 : index
    %c0_11 = arith.constant 0 : index
    %c0_12 = arith.constant 0 : index
    %10 = vector.load %arg3[%c1_10, %c0_11, %c0_12] : memref<4x16x16xf32, #tpu.memory_space<vmem>>, vector<1x16x16xf32>
    %11 = vector.shape_cast %10 : vector<1x16x16xf32> to vector<16x16xf32>
    %12 = vector.shape_cast %9 : vector<16x16xf32> to vector<1x16x16xf32>
    tpu.vector_store %arg3[%c1_10, %c0_11, %c0_12], %12 {strides = array<i32>} : memref<4x16x16xf32, #tpu.memory_space<vmem>>, vector<1x16x16xf32>,
    %c2 = arith.constant 2 : index
    %c0_13 = arith.constant 0 : index
    %c0_14 = arith.constant 0 : index
    %13 = vector.load %arg2[%c2, %c0_13, %c0_14] : memref<4x16x16xf32, #tpu.memory_space<vmem>>, vector<1x16x16xf32>
    %14 = vector.shape_cast %13 : vector<1x16x16xf32> to vector<16x16xf32>
    %cst_15 = arith.constant dense<0.000000e+00> : vector<16x16xf32>
    %15 = tpu.matmul %0, %14, %cst_15 {dimension_numbers = #tpu.dot_dimension_numbers<[1], [0], [0], [1], [0, 0, 1, 1], [], []>} : vector<16x16xf32>, vector<16x16xf32>, vector<16x16xf32> -> vector<16x16xf32>
    %c2_16 = arith.constant 2 : index
    %c0_17 = arith.constant 0 : index
    %c0_18 = arith.constant 0 : index
    %16 = vector.load %arg3[%c2_16, %c0_17, %c0_18] : memref<4x16x16xf32, #tpu.memory_space<vmem>>, vector<1x16x16xf32>
    %17 = vector.shape_cast %16 : vector<1x16x16xf32> to vector<16x16xf32>
    %18 = vector.shape_cast %15 : vector<16x16xf32> to vector<1x16x16xf32>
    tpu.vector_store %arg3[%c2_16, %c0_17, %c0_18], %18 {strides = array<i32>} : memref<4x16x16xf32, #tpu.memory_space<vmem>>, vector<1x16x16xf32>,
    %c3 = arith.constant 3 : index
    %c0_19 = arith.constant 0 : index
    %c0_20 = arith.constant 0 : index
    %19 = vector.load %arg2[%c3, %c0_19, %c0_20] : memref<4x16x16xf32, #tpu.memory_space<vmem>>, vector<1x16x16xf32>
    %20 = vector.shape_cast %19 : vector<1x16x16xf32> to vector<16x16xf32>
    %cst_21 = arith.constant dense<0.000000e+00> : vector<16x16xf32>
    %21 = tpu.matmul %0, %20, %cst_21 {dimension_numbers = #tpu.dot_dimension_numbers<[1], [0], [0], [1], [0, 0, 1, 1], [], []>} : vector<16x16xf32>, vector<16x16xf32>, vector<16x16xf32> -> vector<16x16xf32>
    %c3_22 = arith.constant 3 : index
    %c0_23 = arith.constant 0 : index
    %c0_24 = arith.constant 0 : index
    %22 = vector.load %arg3[%c3_22, %c0_23, %c0_24] : memref<4x16x16xf32, #tpu.memory_space<vmem>>, vector<1x16x16xf32>
    %23 = vector.shape_cast %22 : vector<1x16x16xf32> to vector<16x16xf32>
    %24 = vector.shape_cast %21 : vector<16x16xf32> to vector<1x16x16xf32>
    tpu.vector_store %arg3[%c3_22, %c0_23, %c0_24], %24 {strides = array<i32>} : memref<4x16x16xf32, #tpu.memory_space<vmem>>, vector<1x16x16xf32>,
    return
  }
  func.func @transform_0(%arg0: i32) -> (i32, i32) {
    %c0_i32 = arith.constant 0 : i32
    %c0_i32_0 = arith.constant 0 : i32
    %c0_i32_1 = arith.constant 0 : i32
    return %c0_i32, %c0_i32_0 : i32, i32
  }
  func.func @transform_1(%arg0: i32) -> (i32, i32, i32) {
    %c0_i32 = arith.constant 0 : i32
    %c0_i32_0 = arith.constant 0 : i32
    %c0_i32_1 = arith.constant 0 : i32
    return %arg0, %c0_i32, %c0_i32_0 : i32, i32, i32
  }
  func.func @transform_2(%arg0: i32) -> (i32, i32, i32) {
    %c0_i32 = arith.constant 0 : i32
    %c0_i32_0 = arith.constant 0 : i32
    %c0_i32_1 = arith.constant 0 : i32
    return %arg0, %c0_i32, %c0_i32_0 : i32, i32, i32
  }
}

</mosaic_0001>

<llo_original>
// kernel: tpu_custom_call.1
$region0: #{tpu_custom_call.1}
  #allocation0 [shape = 'u32[]', space=smem, size = 0x4, offset = 0x4, fixed_abs, tag = 'smem constant byte address 0x4 - core index']
  #allocation1 [shape = 'u32[144,128]{1,0:T(1,128)}', space=vmem, size = 0x12000, scoped, tag = 'internal scratch']
  %s0 = inlined_call_operand.hbm [shape: f32[16,16], index: 0, kind: input, shape index: {}]
  %s1 = inlined_call_operand.hbm [shape: f32[8,16,16], index: 1, kind: input, shape index: {}]
  %s2 = inlined_call_operand.hbm [shape: f32[8,16,16], index: 2, kind: output, shape index: {}]
  %s3 = sld [smem:[#allocation0]]
  $region49: #{tpu_custom_call.1} parent=0
    _
  %s5 = ssub.s32 1, %s3
  %s6 = scalar_select 0, %s5, %s3
  $region1: #{tpu_custom_call.1} parent=0
    #allocation2 [shape = 'u8[8192]{0}', space=vmem, size = 0x2000, scoped, tag = 'input window, operand 0, single buffered']
    #allocation3 [shape = 's32[2]{0}', space=sflag, size = 0x8, scoped, tag = 'scoped memory for tpu_custom_call.1']
    #allocation4 [shape = 's32[2]{0}', space=sflag, size = 0x8, scoped, tag = 'scoped memory for tpu_custom_call.1']
    #allocation5 [shape = 'u8[65536]{0}', space=vmem, size = 0x10000, scoped, tag = 'input window, operand 1']
    #allocation6 [shape = 's32[2]{0}', space=sflag, size = 0x8, scoped, tag = 'scoped memory for tpu_custom_call.1']
    #allocation7 [shape = 'u8[65536]{0}', space=vmem, size = 0x10000, scoped, tag = 'output window, operand 0']
    %7 = vsyncpa [#allocation3], 0
    %8 = vsyncpa [#allocation6], 0
    %s9 = scalar_lea.sflag [#allocation6], 1
    %10 = vsyncpa %s9, 0
    %11 = vsyncpa [#allocation4], 0
    %s12 = scalar_lea.sflag [#allocation4], 1
    %13 = vsyncpa %s12, 0
    loop: start=0, step=1, limit=4
    $region2: #{tpu_custom_call.1} parent=1 // loop_pre_header
      _
    $region3: #{tpu_custom_call.1} parent=1 // loop_header
      %s15 = sphi 0, %s19
      %p16 = scmp.ge.s32.totalorder %s15, 4
      %s23 = sphi 0, %s23
      %s25 = sphi 0, %s23
      %s26 = sphi 0, %s25
      %s40 = sphi 0, %s26
      %s46 = sphi 0, %s48
      %s49 = sphi 0, %s46
      %s50 = sphi 0, %s49
      %s66 = sphi 0, %s50
      %s72 = sphi 0, %s74
      %s75 = sphi 0, %s72
      %s76 = sphi 0, %s75
      %s92 = sphi 0, %s76
    $region4: #{tpu_custom_call.1} parent=1 // loop_header_branch
      %18 = sbr.rel (%p16) target = $region8
    $region5: #{tpu_custom_call.1} parent=1 // loop_body
      %s20 = ssub.s32 %s15, 1
      %s21 = ssub.s32 %s15, 2
      %s22 = sadd.s32 %s15, 1
      %s24 = sadd.s32 %s23, 1
      %p27 = scmp.eq.s32.totalorder %s15, 1
      %p28 = scmp.ne.s32.totalorder %s23, %s25
      %p29 = scmp.eq.s32.totalorder %s15, 0
      %p30 = por %p28, %p29
      %p31 = scmp.ne.s32.totalorder %s23, %s25
      %p32 = scmp.eq.s32.totalorder %s20, 1
      %p33 = por %p31, %p32
      %p34 = scmp.ne.s32.totalorder %s25, %s26
      %p35 = scmp.eq.s32.totalorder %s20, 0
      %p36 = por %p34, %p35
      %p37 = scmp.ne.s32.totalorder %s25, %s26
      %p38 = scmp.eq.s32.totalorder %s21, 1
      %p39 = por %p37, %p38
      %p41 = scmp.ne.s32.totalorder %s26, %s40
      %p42 = scmp.eq.s32.totalorder %s21, 0
      %p43 = por %p41, %p42
      %s44 = ssub.s32 %s15, %s22
      %p45 = scmp.eq.s32.totalorder %s44, 0
      %s47 = sadd.s32 %s46, 1
      %s48 = scalar_select %p45, %s46, %s47
      %p51 = pneg %p45
      %p52 = scmp.eq.s32.totalorder %s15, 1
      %p53 = por %p51, %p52
      %p54 = scmp.ne.s32.totalorder %s46, %s49
      %p55 = scmp.eq.s32.totalorder %s15, 0
      %p56 = por %p54, %p55
      %p57 = scmp.ne.s32.totalorder %s46, %s49
      %p58 = scmp.eq.s32.totalorder %s20, 1
      %p59 = por %p57, %p58
      %p60 = scmp.ne.s32.totalorder %s49, %s50
      %p61 = scmp.eq.s32.totalorder %s20, 0
      %p62 = por %p60, %p61
      %p63 = scmp.ne.s32.totalorder %s49, %s50
      %p64 = scmp.eq.s32.totalorder %s21, 1
      %p65 = por %p63, %p64
      %p67 = scmp.ne.s32.totalorder %s50, %s66
      %p68 = scmp.eq.s32.totalorder %s21, 0
      %p69 = por %p67, %p68
      %s70 = ssub.s32 %s15, %s22
      %p71 = scmp.eq.s32.totalorder %s70, 0
      %s73 = sadd.s32 %s72, 1
      %s74 = scalar_select %p71, %s72, %s73
      %p77 = pneg %p71
      %p78 = scmp.eq.s32.totalorder %s15, 1
      %p79 = por %p77, %p78
      %p80 = scmp.ne.s32.totalorder %s72, %s75
      %p81 = scmp.eq.s32.totalorder %s15, 0
      %p82 = por %p80, %p81
      %p83 = scmp.ne.s32.totalorder %s72, %s75
      %p84 = scmp.eq.s32.totalorder %s20, 1
      %p85 = por %p83, %p84
      %p86 = scmp.ne.s32.totalorder %s75, %s76
      %p87 = scmp.eq.s32.totalorder %s20, 0
      %p88 = por %p86, %p87
      %p89 = scmp.ne.s32.totalorder %s75, %s76
      %p90 = scmp.eq.s32.totalorder %s21, 1
      %p91 = por %p89, %p90
      %p93 = scmp.ne.s32.totalorder %s76, %s92
      %p94 = scmp.eq.s32.totalorder %s21, 0
      %p95 = por %p93, %p94
      %p96 = scmp.le.s32.totalorder 1, %s15
      %p97 = scmp.lt.s32.totalorder %s15, 3
      %p98 = pnand %p96, %p97
      %p99 = pneg %p98
      // Predicated region
      $region9: #{tpu_custom_call.1} parent=5 // pred_check
        _
      $region10: #{tpu_custom_call.1} parent=5 // pred_check_branch
        %101 = sbr.rel (%p98) target = $region12
      $region11: #{tpu_custom_call.1} parent=5 // pred_region
        %s102 = ssub.s32 %s15, 1
        // Predicated region
        $region13: #{tpu_custom_call.1} parent=11 // pred_check
          %p103 = pneg %p36
        $region14: #{tpu_custom_call.1} parent=11 // pred_check_branch
          %105 = sbr.rel (%p103) target = $region16
        $region15: #{tpu_custom_call.1} parent=11 // pred_region
          %s107 = ssub.s32 256, 256
          %108 = vsyncadd [#allocation3], %s107
          %s109 = sshll.u32 [#allocation2], 4
          %s110 = int_to_ptr.vmem [resolvable:$true] %s109
          %115 = dma.hbm_to_vmem [thread:$0]  %s0, 256, %s110, [#allocation3], 128, 128, 8
        $region16: #{tpu_custom_call.1} parent=11 // pred_fallthru
          _
      $region12: #{tpu_custom_call.1} parent=5 // pred_fallthru
        _
      %p116 = scmp.lt.s32.totalorder %s15, 2
      // Predicated region
      $region17: #{tpu_custom_call.1} parent=5 // pred_check
        %p117 = pneg %p116
      $region18: #{tpu_custom_call.1} parent=5 // pred_check_branch
        %119 = sbr.rel (%p117) target = $region20
      $region19: #{tpu_custom_call.1} parent=5 // pred_region
        // Predicated region
        $region21: #{tpu_custom_call.1} parent=19 // pred_check
          %p120 = pneg %p56
        $region22: #{tpu_custom_call.1} parent=19 // pred_check_branch
          %122 = sbr.rel (%p120) target = $region24
        $region23: #{tpu_custom_call.1} parent=19 // pred_region
          %s123 = sand.u32 %s46, 1
          %s124 = scalar_lea.sflag [#allocation6], %s123
          %s125 = sand.u32 %s46, 1
          %s126 = smul.addr %s125, 64
          %s127 = scalar_lea.vmem [#allocation5], %s126
          %s128 = smul.u32 4, %s15
          %s130 = ssub.s32 1024, 1024
          %131 = vsyncadd %s124, %s130
          %s132 = smul.addr %s128, 2
          %s133 = smul.addr %s132, 128
          %s134 = scalar_lea.hbm %s1, %s133
          %s135 = sshll.u32 %s127, 4
          %s136 = int_to_ptr.vmem [resolvable:$true] %s135
          %141 = dma.hbm_to_vmem [thread:$0]  %s134, 1024, %s136, %s124, 128, 128, 8
        $region24: #{tpu_custom_call.1} parent=19 // pred_fallthru
          _
      $region20: #{tpu_custom_call.1} parent=5 // pred_fallthru
        _
      %p142 = scmp.le.s32.totalorder 1, %s15
      %p143 = scmp.lt.s32.totalorder %s15, 3
      %p144 = pnand %p142, %p143
      %p145 = pneg %p144
      // Predicated region
      $region25: #{tpu_custom_call.1} parent=5 // pred_check
        _
      $region26: #{tpu_custom_call.1} parent=5 // pred_check_branch
        %147 = sbr.rel (%p144) target = $region28
      $region27: #{tpu_custom_call.1} parent=5 // pred_region
        %s148 = ssub.s32 %s15, 1
        // Predicated region
        $region29: #{tpu_custom_call.1} parent=27 // pred_check
          %p149 = pneg %p36
        $region30: #{tpu_custom_call.1} parent=27 // pred_check_branch
          %151 = sbr.rel (%p149) target = $region32
        $region31: #{tpu_custom_call.1} parent=27 // pred_region
          %152 = dma.done [#allocation3], 256
        $region32: #{tpu_custom_call.1} parent=27 // pred_fallthru
          _
        %s153 = sand.u32 %s49, 1
        %s154 = scalar_lea.sflag [#allocation6], %s153
        %s155 = sand.u32 %s49, 1
        %s156 = smul.addr %s155, 64
        %s157 = scalar_lea.vmem [#allocation5], %s156
        // Predicated region
        $region33: #{tpu_custom_call.1} parent=27 // pred_check
          %p158 = pneg %p62
        $region34: #{tpu_custom_call.1} parent=27 // pred_check_branch
          %160 = sbr.rel (%p158) target = $region36
        $region35: #{tpu_custom_call.1} parent=27 // pred_region
          %161 = dma.done %s154, 1024
        $region36: #{tpu_custom_call.1} parent=27 // pred_fallthru
          _
        %p162 = pneg %p36
        %p163 = pneg %p33
        %s164 = sand.u32 %s49, 1
        %s165 = scalar_lea.sflag [#allocation6], %s164
        %s166 = sand.u32 %s49, 1
        %s167 = smul.addr %s166, 64
        %s168 = scalar_lea.vmem [#allocation5], %s167
        %p169 = pneg %p62
        %p170 = pneg %p59
        %p171 = pneg %p88
        %p172 = pneg %p85
        %s173 = sand.u32 %s75, 1
        %s174 = scalar_lea.sflag [#allocation4], %s173
        %s175 = sand.u32 %s75, 1
        %s176 = smul.addr %s175, 64
        %s177 = scalar_lea.vmem [#allocation7], %s176
        %s178 = smul.u32 4, %s20
        %s179 = smul.u32 4, %s20
        %v180 = vld [vmem:[#allocation2] sm:$0xff]
        %v181 = vld [vmem:[#allocation2 + $0x8] sm:$0xff]
        %v182 = vld [vmem:[%s157] sm:$0xff]
        %v183 = vld [vmem:[%s157 + $0x8] sm:$0xff]
        %vm184 = vcmask 130048
        %v186 = vsel %vm184, %v180, 0
        %v189 = vsel %vm184, %v181, 0
        %191 = vmatprep.subr.mxu0 0.0
        %192 = vmatpush1.msra.mxu0 %v182
        %193 = vmatprep.subr.mxu0 0.0
        %194 = vmatpush1.msra.mxu0 %v183
        %195 = vmatprep.subr.mxu0 0.0
        %196 = vmatpush1.msra.mxu0 0.0
        %197 = vmatprep.subr.mxu0 0.0
        %198 = vmatpush1.msra.mxu0 0.0
        %199 = vmatprep.subr.mxu0 0.0
        %200 = vmatpush1.msra.mxu0 0.0
        %201 = vmatprep.subr.mxu0 0.0
        %202 = vmatpush1.msra.mxu0 0.0
        %203 = vmatprep.subr.mxu0 0.0
        %204 = vmatpush1.msra.mxu0 0.0
        %205 = vmatprep.subr.mxu0 0.0
        %206 = vmatpush1.msra.mxu0 0.0
        %207 = vmatprep.subr.mxu0 0.0
        %208 = vmatpush1.msra.mxu0 0.0
        %209 = vmatprep.subr.mxu0 0.0
        %210 = vmatpush1.msra.mxu0 0.0
        %211 = vmatprep.subr.mxu0 0.0
        %212 = vmatpush1.msra.mxu0 0.0
        %213 = vmatprep.subr.mxu0 0.0
        %214 = vmatpush1.msra.mxu0 0.0
        %215 = vmatprep.subr.mxu0 0.0
        %216 = vmatpush1.msra.mxu0 0.0
        %217 = vmatprep.subr.mxu0 0.0
        %218 = vmatpush1.msra.mxu0 0.0
        %219 = vmatprep.subr.mxu0 0.0
        %220 = vmatpush1.msra.mxu0 0.0
        %221 = vmatprep.subr.mxu0 0.0
        %222 = vmatpush1.msra.mxu0 0.0
        %223 = vmatprep.subr.mxu0 0.0
        %224 = vmatpush1.msra.mxu0 0.0
        %225 = vmatprep.subr.mxu0 0.0
        %226 = vmatpush1.msra.mxu0 0.0
        %227 = vmatprep.subr.mxu0 0.0
        %228 = vmatpush1.msra.mxu0 0.0
        %229 = vmatprep.subr.mxu0 0.0
        %230 = vmatpush1.msra.mxu0 0.0
        %231 = vmatprep.subr.mxu0 0.0
        %232 = vmatpush1.msra.mxu0 0.0
        %233 = vmatprep.subr.mxu0 0.0
        %234 = vmatpush1.msra.mxu0 0.0
        %235 = vmatprep.subr.mxu0 0.0
        %236 = vmatpush1.msra.mxu0 0.0
        %237 = vmatprep.subr.mxu0 0.0
        %238 = vmatpush1.msra.mxu0 0.0
        %239 = vmatprep.subr.mxu0 0.0
        %240 = vmatpush1.msra.mxu0 0.0
        %241 = vmatprep.subr.mxu0 0.0
        %242 = vmatpush1.msra.mxu0 0.0
        %243 = vmatprep.subr.mxu0 0.0
        %244 = vmatpush1.msra.mxu0 0.0
        %245 = vmatprep.subr.mxu0 0.0
        %246 = vmatpush1.msra.mxu0 0.0
        %247 = vmatprep.subr.mxu0 0.0
        %248 = vmatpush1.msra.mxu0 0.0
        %249 = vmatprep.subr.mxu0 0.0
        %250 = vmatpush1.msra.mxu0 0.0
        %251 = vmatprep.subr.mxu0 0.0
        %252 = vmatpush1.msra.mxu0 0.0
        %253 = vmatprep.subr.mxu0 0.0
        %254 = vmatpush1.msra.mxu0 0.0
        %255 = vmatprep.mubr.f32.mxu0 0.0
        %256 = vmatmul.mubr.f32.gmra.mrb[0].mxu0 %v186
        %v257 = vpop.f32.mrb[0].mxu0
        %v258 = vadd.f32 0.0, %v257
        %v259 = vpop.f32.mrb[0].mxu0
        %260 = vmatprep.mubr.f32.mxu0 0.0
        %261 = vmatmul.mubr.f32.gmra.mrb[0].mxu0 %v189
        %v262 = vpop.f32.mrb[0].mxu0
        %v263 = vadd.f32 0.0, %v262
        %v264 = vpop.f32.mrb[0].mxu0
        %265 = vdwg.mxu0
        %266 = vst.msk [vmem:[%s177] sm:$0xff] %vm184, %v258
        %267 = vst.msk [vmem:[%s177 + $0x8] sm:$0xff] %vm184, %v263
        %s268 = scalar_lea.vmem %s157, 16 [#allocation5]
        %v269 = vld [vmem:[%s268] sm:$0xff]
        %v270 = vld [vmem:[%s268 + $0x8] sm:$0xff]
        %271 = vmatprep.subr.mxu0 0.0
        %272 = vmatpush1.msra.mxu0 %v269
        %273 = vmatprep.subr.mxu0 0.0
        %274 = vmatpush1.msra.mxu0 %v270
        %275 = vmatprep.subr.mxu0 0.0
        %276 = vmatpush1.msra.mxu0 0.0
        %277 = vmatprep.subr.mxu0 0.0
        %278 = vmatpush1.msra.mxu0 0.0
        %279 = vmatprep.subr.mxu0 0.0
        %280 = vmatpush1.msra.mxu0 0.0
        %281 = vmatprep.subr.mxu0 0.0
        %282 = vmatpush1.msra.mxu0 0.0
        %283 = vmatprep.subr.mxu0 0.0
        %284 = vmatpush1.msra.mxu0 0.0
        %285 = vmatprep.subr.mxu0 0.0
        %286 = vmatpush1.msra.mxu0 0.0
        %287 = vmatprep.subr.mxu0 0.0
        %288 = vmatpush1.msra.mxu0 0.0
        %289 = vmatprep.subr.mxu0 0.0
        %290 = vmatpush1.msra.mxu0 0.0
        %291 = vmatprep.subr.mxu0 0.0
        %292 = vmatpush1.msra.mxu0 0.0
        %293 = vmatprep.subr.mxu0 0.0
        %294 = vmatpush1.msra.mxu0 0.0
        %295 = vmatprep.subr.mxu0 0.0
        %296 = vmatpush1.msra.mxu0 0.0
        %297 = vmatprep.subr.mxu0 0.0
        %298 = vmatpush1.msra.mxu0 0.0
        %299 = vmatprep.subr.mxu0 0.0
        %300 = vmatpush1.msra.mxu0 0.0
        %301 = vmatprep.subr.mxu0 0.0
        %302 = vmatpush1.msra.mxu0 0.0
        %303 = vmatprep.subr.mxu0 0.0
        %304 = vmatpush1.msra.mxu0 0.0
        %305 = vmatprep.subr.mxu0 0.0
        %306 = vmatpush1.msra.mxu0 0.0
        %307 = vmatprep.subr.mxu0 0.0
        %308 = vmatpush1.msra.mxu0 0.0
        %309 = vmatprep.subr.mxu0 0.0
        %310 = vmatpush1.msra.mxu0 0.0
        %311 = vmatprep.subr.mxu0 0.0
        %312 = vmatpush1.msra.mxu0 0.0
        %313 = vmatprep.subr.mxu0 0.0
        %314 = vmatpush1.msra.mxu0 0.0
        %315 = vmatprep.subr.mxu0 0.0
        %316 = vmatpush1.msra.mxu0 0.0
        %317 = vmatprep.subr.mxu0 0.0
        %318 = vmatpush1.msra.mxu0 0.0
        %319 = vmatprep.subr.mxu0 0.0
        %320 = vmatpush1.msra.mxu0 0.0
        %321 = vmatprep.subr.mxu0 0.0
        %322 = vmatpush1.msra.mxu0 0.0
        %323 = vmatprep.subr.mxu0 0.0
        %324 = vmatpush1.msra.mxu0 0.0
        %325 = vmatprep.subr.mxu0 0.0
        %326 = vmatpush1.msra.mxu0 0.0
        %327 = vmatprep.subr.mxu0 0.0
        %328 = vmatpush1.msra.mxu0 0.0
        %329 = vmatprep.subr.mxu0 0.0
        %330 = vmatpush1.msra.mxu0 0.0
        %331 = vmatprep.subr.mxu0 0.0
        %332 = vmatpush1.msra.mxu0 0.0
        %333 = vmatprep.subr.mxu0 0.0
        %334 = vmatpush1.msra.mxu0 0.0
        %335 = vmatprep.mubr.f32.mxu0 0.0
        %336 = vmatmul.mubr.f32.gmra.mrb[0].mxu0 %v186
        %v337 = vpop.f32.mrb[0].mxu0
        %v338 = vadd.f32 0.0, %v337
        %v339 = vpop.f32.mrb[0].mxu0
        %340 = vmatprep.mubr.f32.mxu0 0.0
        %341 = vmatmul.mubr.f32.gmra.mrb[0].mxu0 %v189
        %v342 = vpop.f32.mrb[0].mxu0
        %v343 = vadd.f32 0.0, %v342
        %v344 = vpop.f32.mrb[0].mxu0
        %345 = vdwg.mxu0
        %s346 = scalar_lea.vmem %s177, 16 [#allocation7]
        %347 = vst.msk [vmem:[%s346] sm:$0xff] %vm184, %v338
        %348 = vst.msk [vmem:[%s346 + $0x8] sm:$0xff] %vm184, %v343
        %s349 = scalar_lea.vmem %s157, 32 [#allocation5]
        %v350 = vld [vmem:[%s349] sm:$0xff]
        %v351 = vld [vmem:[%s349 + $0x8] sm:$0xff]
        %352 = vmatprep.subr.mxu0 0.0
        %353 = vmatpush1.msra.mxu0 %v350
        %354 = vmatprep.subr.mxu0 0.0
        %355 = vmatpush1.msra.mxu0 %v351
        %356 = vmatprep.subr.mxu0 0.0
        %357 = vmatpush1.msra.mxu0 0.0
        %358 = vmatprep.subr.mxu0 0.0
        %359 = vmatpush1.msra.mxu0 0.0
        %360 = vmatprep.subr.mxu0 0.0
        %361 = vmatpush1.msra.mxu0 0.0
        %362 = vmatprep.subr.mxu0 0.0
        %363 = vmatpush1.msra.mxu0 0.0
        %364 = vmatprep.subr.mxu0 0.0
        %365 = vmatpush1.msra.mxu0 0.0
        %366 = vmatprep.subr.mxu0 0.0
        %367 = vmatpush1.msra.mxu0 0.0
        %368 = vmatprep.subr.mxu0 0.0
        %369 = vmatpush1.msra.mxu0 0.0
        %370 = vmatprep.subr.mxu0 0.0
        %371 = vmatpush1.msra.mxu0 0.0
        %372 = vmatprep.subr.mxu0 0.0
        %373 = vmatpush1.msra.mxu0 0.0
        %374 = vmatprep.subr.mxu0 0.0
        %375 = vmatpush1.msra.mxu0 0.0
        %376 = vmatprep.subr.mxu0 0.0
        %377 = vmatpush1.msra.mxu0 0.0
        %378 = vmatprep.subr.mxu0 0.0
        %379 = vmatpush1.msra.mxu0 0.0
        %380 = vmatprep.subr.mxu0 0.0
        %381 = vmatpush1.msra.mxu0 0.0
        %382 = vmatprep.subr.mxu0 0.0
        %383 = vmatpush1.msra.mxu0 0.0
        %384 = vmatprep.subr.mxu0 0.0
        %385 = vmatpush1.msra.mxu0 0.0
        %386 = vmatprep.subr.mxu0 0.0
        %387 = vmatpush1.msra.mxu0 0.0
        %388 = vmatprep.subr.mxu0 0.0
        %389 = vmatpush1.msra.mxu0 0.0
        %390 = vmatprep.subr.mxu0 0.0
        %391 = vmatpush1.msra.mxu0 0.0
        %392 = vmatprep.subr.mxu0 0.0
        %393 = vmatpush1.msra.mxu0 0.0
        %394 = vmatprep.subr.mxu0 0.0
        %395 = vmatpush1.msra.mxu0 0.0
        %396 = vmatprep.subr.mxu0 0.0
        %397 = vmatpush1.msra.mxu0 0.0
        %398 = vmatprep.subr.mxu0 0.0
        %399 = vmatpush1.msra.mxu0 0.0
        %400 = vmatprep.subr.mxu0 0.0
        %401 = vmatpush1.msra.mxu0 0.0
        %402 = vmatprep.subr.mxu0 0.0
        %403 = vmatpush1.msra.mxu0 0.0
        %404 = vmatprep.subr.mxu0 0.0
        %405 = vmatpush1.msra.mxu0 0.0
        %406 = vmatprep.subr.mxu0 0.0
        %407 = vmatpush1.msra.mxu0 0.0
        %408 = vmatprep.subr.mxu0 0.0
        %409 = vmatpush1.msra.mxu0 0.0
        %410 = vmatprep.subr.mxu0 0.0
        %411 = vmatpush1.msra.mxu0 0.0
        %412 = vmatprep.subr.mxu0 0.0
        %413 = vmatpush1.msra.mxu0 0.0
        %414 = vmatprep.subr.mxu0 0.0
        %415 = vmatpush1.msra.mxu0 0.0
        %416 = vmatprep.mubr.f32.mxu0 0.0
        %417 = vmatmul.mubr.f32.gmra.mrb[0].mxu0 %v186
        %v418 = vpop.f32.mrb[0].mxu0
        %v419 = vadd.f32 0.0, %v418
        %v420 = vpop.f32.mrb[0].mxu0
        %421 = vmatprep.mubr.f32.mxu0 0.0
        %422 = vmatmul.mubr.f32.gmra.mrb[0].mxu0 %v189
        %v423 = vpop.f32.mrb[0].mxu0
        %v424 = vadd.f32 0.0, %v423
        %v425 = vpop.f32.mrb[0].mxu0
        %426 = vdwg.mxu0
        %s427 = scalar_lea.vmem %s177, 32 [#allocation7]
        %428 = vst.msk [vmem:[%s427] sm:$0xff] %vm184, %v419
        %429 = vst.msk [vmem:[%s427 + $0x8] sm:$0xff] %vm184, %v424
        %s430 = scalar_lea.vmem %s157, 48 [#allocation5]
        %v431 = vld [vmem:[%s430] sm:$0xff]
        %v432 = vld [vmem:[%s430 + $0x8] sm:$0xff]
        %433 = vmatprep.subr.mxu0 0.0
        %434 = vmatpush1.msra.mxu0 %v431
        %435 = vmatprep.subr.mxu0 0.0
        %436 = vmatpush1.msra.mxu0 %v432
        %437 = vmatprep.subr.mxu0 0.0
        %438 = vmatpush1.msra.mxu0 0.0
        %439 = vmatprep.subr.mxu0 0.0
        %440 = vmatpush1.msra.mxu0 0.0
        %441 = vmatprep.subr.mxu0 0.0
        %442 = vmatpush1.msra.mxu0 0.0
        %443 = vmatprep.subr.mxu0 0.0
        %444 = vmatpush1.msra.mxu0 0.0
        %445 = vmatprep.subr.mxu0 0.0
        %446 = vmatpush1.msra.mxu0 0.0
        %447 = vmatprep.subr.mxu0 0.0
        %448 = vmatpush1.msra.mxu0 0.0
        %449 = vmatprep.subr.mxu0 0.0
        %450 = vmatpush1.msra.mxu0 0.0
        %451 = vmatprep.subr.mxu0 0.0
        %452 = vmatpush1.msra.mxu0 0.0
        %453 = vmatprep.subr.mxu0 0.0
        %454 = vmatpush1.msra.mxu0 0.0
        %455 = vmatprep.subr.mxu0 0.0
        %456 = vmatpush1.msra.mxu0 0.0
        %457 = vmatprep.subr.mxu0 0.0
        %458 = vmatpush1.msra.mxu0 0.0
        %459 = vmatprep.subr.mxu0 0.0
        %460 = vmatpush1.msra.mxu0 0.0
        %461 = vmatprep.subr.mxu0 0.0
        %462 = vmatpush1.msra.mxu0 0.0
        %463 = vmatprep.subr.mxu0 0.0
        %464 = vmatpush1.msra.mxu0 0.0
        %465 = vmatprep.subr.mxu0 0.0
        %466 = vmatpush1.msra.mxu0 0.0
        %467 = vmatprep.subr.mxu0 0.0
        %468 = vmatpush1.msra.mxu0 0.0
        %469 = vmatprep.subr.mxu0 0.0
        %470 = vmatpush1.msra.mxu0 0.0
        %471 = vmatprep.subr.mxu0 0.0
        %472 = vmatpush1.msra.mxu0 0.0
        %473 = vmatprep.subr.mxu0 0.0
        %474 = vmatpush1.msra.mxu0 0.0
        %475 = vmatprep.subr.mxu0 0.0
        %476 = vmatpush1.msra.mxu0 0.0
        %477 = vmatprep.subr.mxu0 0.0
        %478 = vmatpush1.msra.mxu0 0.0
        %479 = vmatprep.subr.mxu0 0.0
        %480 = vmatpush1.msra.mxu0 0.0
        %481 = vmatprep.subr.mxu0 0.0
        %482 = vmatpush1.msra.mxu0 0.0
        %483 = vmatprep.subr.mxu0 0.0
        %484 = vmatpush1.msra.mxu0 0.0
        %485 = vmatprep.subr.mxu0 0.0
        %486 = vmatpush1.msra.mxu0 0.0
        %487 = vmatprep.subr.mxu0 0.0
        %488 = vmatpush1.msra.mxu0 0.0
        %489 = vmatprep.subr.mxu0 0.0
        %490 = vmatpush1.msra.mxu0 0.0
        %491 = vmatprep.subr.mxu0 0.0
        %492 = vmatpush1.msra.mxu0 0.0
        %493 = vmatprep.subr.mxu0 0.0
        %494 = vmatpush1.msra.mxu0 0.0
        %495 = vmatprep.subr.mxu0 0.0
        %496 = vmatpush1.msra.mxu0 0.0
        %497 = vmatprep.mubr.f32.mxu0 0.0
        %498 = vmatmul.mubr.f32.gmra.mrb[0].mxu0 %v186
        %v499 = vpop.f32.mrb[0].mxu0
        %v500 = vadd.f32 0.0, %v499
        %v501 = vpop.f32.mrb[0].mxu0
        %502 = vmatprep.mubr.f32.mxu0 0.0
        %503 = vmatmul.mubr.f32.gmra.mrb[0].mxu0 %v189
        %v504 = vpop.f32.mrb[0].mxu0
        %v505 = vadd.f32 0.0, %v504
        %v506 = vpop.f32.mrb[0].mxu0
        %507 = vdwg.mxu0
        %s508 = scalar_lea.vmem %s177, 48 [#allocation7]
        %509 = vst.msk [vmem:[%s508] sm:$0xff] %vm184, %v500
        %510 = vst.msk [vmem:[%s508 + $0x8] sm:$0xff] %vm184, %v505
        %s511 = sand.u32 %s75, 1
        %s512 = scalar_lea.sflag [#allocation4], %s511
        %s513 = sand.u32 %s75, 1
        %s514 = smul.addr %s513, 64
        %s515 = scalar_lea.vmem [#allocation7], %s514
        // Predicated region
        $region37: #{tpu_custom_call.1} parent=27 // pred_check
          %p516 = pneg %p85
        $region38: #{tpu_custom_call.1} parent=27 // pred_check_branch
          %518 = sbr.rel (%p516) target = $region40
        $region39: #{tpu_custom_call.1} parent=27 // pred_region
          %s519 = smul.u32 4, %s20
          %s521 = ssub.s32 1024, 1024
          %522 = vsyncadd %s512, %s521
          %s523 = smul.addr %s519, 2
          %s524 = smul.addr %s523, 128
          %s525 = scalar_lea.hbm %s2, %s524
          %s526 = sshll.u32 %s515, 4
          %s527 = int_to_ptr.vmem [resolvable:$true] %s526
          %532 = dma.vmem_to_hbm [thread:$0]  %s527, 1024, %s525, %s512, 128, 128, 8
        $region40: #{tpu_custom_call.1} parent=27 // pred_fallthru
          _
      $region28: #{tpu_custom_call.1} parent=5 // pred_fallthru
        _
      %p533 = scmp.le.s32.totalorder 2, %s15
      // Predicated region
      $region41: #{tpu_custom_call.1} parent=5 // pred_check
        %p534 = pneg %p533
      $region42: #{tpu_custom_call.1} parent=5 // pred_check_branch
        %536 = sbr.rel (%p534) target = $region44
      $region43: #{tpu_custom_call.1} parent=5 // pred_region
        %s537 = ssub.s32 %s15, 2
        // Predicated region
        $region45: #{tpu_custom_call.1} parent=43 // pred_check
          %p538 = pneg %p91
        $region46: #{tpu_custom_call.1} parent=43 // pred_check_branch
          %540 = sbr.rel (%p538) target = $region48
        $region47: #{tpu_custom_call.1} parent=43 // pred_region
          %s541 = sand.u32 %s76, 1
          %s542 = scalar_lea.sflag [#allocation4], %s541
          %s543 = sand.u32 %s76, 1
          %s544 = smul.addr %s543, 64
          %s545 = scalar_lea.vmem [#allocation7], %s544
          %546 = dma.done %s542, 1024
        $region48: #{tpu_custom_call.1} parent=43 // pred_fallthru
          _
      $region44: #{tpu_custom_call.1} parent=5 // pred_fallthru
        _
    $region6: #{tpu_custom_call.1} parent=1 // loop_footer
      %s19 = sadd.s32 1, %s15
    $region7: #{tpu_custom_call.1} parent=1 // loop_footer_branch
      %14 = sbr.rel target = $region3
    $region8: #{tpu_custom_call.1} parent=1 // loop_exit
      _
    %547 = vsyncpa [#allocation3], 1
    %s548 = scalar_lea.sflag [#allocation3], 1
    %549 = vsyncpa %s548, 1
    %550 = vsyncpa [#allocation6], 1
    %s551 = scalar_lea.sflag [#allocation6], 1
    %552 = vsyncpa %s551, 1
    %553 = vsyncpa [#allocation4], 1
    %s554 = scalar_lea.sflag [#allocation4], 1
    %555 = vsyncpa %s554, 1

</llo_original>
